<compile_context>
chip_gen: v7x
topology: tpu7x:2x2x1
jax: 0.10.0
libtpu: 0.0.40
codegen_flags: <defaults>
</compile_context>

<pallas_src>
import math

import jax
import jax.numpy as jnp
from jax.experimental import pallas as pl
from jax.experimental.pallas import tpu as pltpu


_TARGET_BLOCK_BYTES = 8 * 1024 * 1024    # ~8 MiB per input tile (review: 6-8 MiB)
_VMEM_LIMIT_BYTES = 48 * 1024 * 1024     # 2 inputs x 2 buffers x 8 MiB + slack


def _cdiv(a, b):
    return -(-a // b)


def _round_up(a, b):
    return _cdiv(a, b) * b


def _make_kernel(order: int, lane: int, weights):
    """`order`, `lane`, `weights` are static Python values -> the higher-order
    difference loop is fully unrolled at trace time."""

    def kernel(gid_ref, pred_ref, targ_ref, out_ref):
        # d = pred - target; its iterated consecutive difference equals
        # (pred_dif - target_dif) at every order.
        d = pred_ref[...].astype(jnp.float32) - targ_ref[...].astype(jnp.float32)
        gid = gid_ref[...]                       # (1, lane) group id per lane

        acc_row = jnp.zeros((1, lane), dtype=jnp.float32)
        for o in range(1, order + 1):
            # In-row circular shift by one lane; direction-agnostic because the
            # mask below is built with the *same* net permutation of group ids.
            d = pltpu.roll(d, shift=lane - 1, axis=1) - d
            # Lane i holds a valid o-th order difference iff its o-away partner
            # lies in the same consecutive group (cheap: (1, lane) row ops).
            gid_o = pltpu.roll(gid, shift=lane - o, axis=1)
            mask_w = jnp.where(gid_o == gid, weights[o - 1], 0.0)   # (1, lane)
            # Sublane-only column reduction of d*d (no full-tile select).
            col_sq = jnp.sum(d * d, axis=0, keepdims=True)          # (1, lane)
            acc_row = acc_row + col_sq * mask_w

        # Lane-dense per-tile partial (unmasked vector store).
        out_ref[...] = acc_row.reshape(1, 1, lane)

    return kernel


def consecutive_difference_higher_order_loss(prediction, target,
                                             consecutive_size: int,
                                             order: int = 1):
    """Forward pass matching the PyTorch module. Returns shape (1,) float32."""
    consec = int(consecutive_size)
    order = int(order)
    assert order >= 1
    assert consec - order >= 1, "consecutive_size must exceed order"

    pred_flat = jnp.ravel(prediction)
    targ_flat = jnp.ravel(target)
    total = pred_flat.shape[0]
    assert total % consec == 0
    n_rows = total // consec                     # N of the reference reshape

    # ---- lane-dense layout: `lane` multiple of 128 and of consecutive_size ----
    lane = consec * 128 // math.gcd(consec, 128)      # lcm(consec, 128)
    if lane // consec < 2:                             # keep >= 2 groups per row
        lane *= 2
    while lane < 512 and total >= lane * 2 * 8:        # widen toward ~512 lanes
        lane *= 2

    # ---- dtype-aware tile sizing ----
    p_isz = jnp.dtype(pred_flat.dtype).itemsize
    t_isz = jnp.dtype(targ_flat.dtype).itemsize
    # packed-tile minimum rows: 8 for 4-byte, 16 for 2-byte, 32 for 1-byte
    row_align = max(8, 32 // min(p_isz, t_isz))
    rows_needed = _cdiv(total, lane)

    budget_rows = max(row_align,
                      (_TARGET_BLOCK_BYTES // (max(p_isz, t_isz) * lane))
                      // row_align * row_align)
    # Cap the tile so grid >= 2 whenever possible (megacore on v7x).
    tile_cap = _round_up(rows_needed, row_align)
    if rows_needed > row_align:
        tile_cap = min(tile_cap, _round_up(_cdiv(rows_needed, 2), row_align))
    tile_rows = min(budget_rows, tile_cap)
    grid = _cdiv(rows_needed, tile_rows)
    rows_padded = grid * tile_rows

    pad = rows_padded * lane - total
    if pad:
        # Zero padding starts on a group boundary -> contributes exactly zero.
        pred_flat = jnp.pad(pred_flat, (0, pad))
        targ_flat = jnp.pad(targ_flat, (0, pad))
    pred2 = pred_flat.reshape(rows_padded, lane)
    targ2 = targ_flat.reshape(rows_padded, lane)

    # Per-lane group id (small integers, exact in f32; stays resident in VMEM).
    gid = (jnp.arange(lane, dtype=jnp.int32) // consec).astype(jnp.float32)
    gid = gid.reshape(1, lane)

    # Fold each order's 1/denominator (mean over N*(consec-o) elems, /order)
    # into compile-time constants.
    weights = tuple(1.0 / (float(n_rows) * float(consec - o) * float(order))
                    for o in range(1, order + 1))

    partials = pl.pallas_call(
        _make_kernel(order, lane, weights),
        out_shape=jax.ShapeDtypeStruct((grid, 1, lane), jnp.float32),
        grid=(grid,),
        in_specs=[
            pl.BlockSpec((1, lane), lambda i: (0, 0)),             # gid (resident)
            pl.BlockSpec((tile_rows, lane), lambda i: (i, 0)),     # prediction block
            pl.BlockSpec((tile_rows, lane), lambda i: (i, 0)),     # target block
        ],
        out_specs=pl.BlockSpec((1, 1, lane), lambda i: (i, 0, 0)), # per-tile partial
        compiler_params=pltpu.CompilerParams(
            dimension_semantics=("parallel",),   # independent tiles -> megacore
            vmem_limit_bytes=_VMEM_LIMIT_BYTES,
        ),
    )(gid, pred2, targ2)

    return jnp.sum(partials, dtype=jnp.float32).reshape(1)


def _reference(prediction, target, consecutive_size, order):
    """Pure-JAX transcription of the PyTorch forward, for verification."""
    pr = prediction.reshape(-1, consecutive_size)
    tr = target.reshape(-1, consecutive_size)
    result = jnp.zeros(1, dtype=jnp.float32)
    pa, pb = pr[:, 1:], pr[:, :-1]
    ta, tb = tr[:, 1:], tr[:, :-1]
    for _ in range(order):
        pd = pa - pb
        td = ta - tb
        pa, pb = pd[:, 1:], pd[:, :-1]
        ta, tb = td[:, 1:], td[:, :-1]
        result = result + jnp.mean((pd - td) ** 2) / order
    return result


if __name__ == "__main__":
    consecutive_size = 16
    order = 2

    key = jax.random.PRNGKey(0)
    k1, k2 = jax.random.split(key)
    # (2, 4, 16, 16) = 2048 elems -> 128 groups of consecutive_size=16.
    prediction = jax.random.normal(k1, (2, 4, 16, 16), dtype=jnp.float32)
    target = jax.random.normal(k2, (2, 4, 16, 16), dtype=jnp.float32)

    loss = consecutive_difference_higher_order_loss(
        prediction, target, consecutive_size, order)
    loss = jax.block_until_ready(loss)

    ref = _reference(prediction, target, consecutive_size, order)
    assert loss.shape == (1,)
    assert jnp.allclose(loss, ref, rtol=1e-4, atol=1e-6), (loss, ref)

    print("KERNEL_OK")
</pallas_src>

<mosaic_0001>
module attributes {stable_mosaic.version = 11 : i64} {
  func.func @kernel(%arg0: i32, %arg1: memref<1x256xf32, #tpu.memory_space<vmem>>, %arg2: memref<8x256xf32, #tpu.memory_space<vmem>>, %arg3: memref<8x256xf32, #tpu.memory_space<vmem>>, %arg4: memref<1x1x256xf32, #tpu.memory_space<vmem>>) attributes {dimension_semantics = [#tpu.dimension_semantics<parallel>], iteration_bounds = array<i64: 1>, scalar_prefetch = 0 : i64, scratch_operands = 0 : i64, tpu.core_type = #tpu.core_type<tc>, window_params = [{pipeline_mode = #tpu.pipeline_mode<synchronous>, transform_indices = @transform_0, window_bounds = array<i64: 1, 256>}, {transform_indices = @transform_1, window_bounds = array<i64: 8, 256>}, {transform_indices = @transform_2, window_bounds = array<i64: 8, 256>}, {transform_indices = @transform_3, window_bounds = array<i64: 1, 1, 256>}]} {
    %c0 = arith.constant 0 : index
    %c0_0 = arith.constant 0 : index
    %0 = vector.load %arg2[%c0, %c0_0] : memref<8x256xf32, #tpu.memory_space<vmem>>, vector<8x256xf32>
    %c0_1 = arith.constant 0 : index
    %c0_2 = arith.constant 0 : index
    %1 = vector.load %arg3[%c0_1, %c0_2] : memref<8x256xf32, #tpu.memory_space<vmem>>, vector<8x256xf32>
    %2 = arith.subf %0, %1 : vector<8x256xf32>
    %c0_3 = arith.constant 0 : index
    %c0_4 = arith.constant 0 : index
    %3 = vector.load %arg1[%c0_3, %c0_4] : memref<1x256xf32, #tpu.memory_space<vmem>>, vector<1x256xf32>
    %cst = arith.constant 0.000000e+00 : f32
    %4 = vector.broadcast %cst : f32 to vector<1x256xf32>
    %c255_i32 = arith.constant 255 : i32
    %5 = tpu.dynamic_rotate %2 by %c255_i32 dim 1 : vector<8x256xf32>, i32 -> vector<8x256xf32>
    %6 = arith.subf %5, %2 : vector<8x256xf32>
    %c255_i32_5 = arith.constant 255 : i32
    %7 = tpu.dynamic_rotate %3 by %c255_i32_5 dim 1 : vector<1x256xf32>, i32 -> vector<1x256xf32>
    %8 = arith.cmpf oeq, %7, %3 : vector<1x256xf32>
    %cst_6 = arith.constant 2.6041668E-4 : f32
    %cst_7 = arith.constant 0.000000e+00 : f32
    %9 = vector.broadcast %cst_6 : f32 to vector<1x256xf32>
    %10 = vector.broadcast %cst_7 : f32 to vector<1x256xf32>
    %11 = arith.select %8, %9, %10 : vector<1x256xi1>, vector<1x256xf32>
    %12 = arith.mulf %6, %6 : vector<8x256xf32>
    %cst_8 = arith.constant dense<0.000000e+00> : vector<256xf32>
    %13 = vector.multi_reduction <add>, %12, %cst_8 [0] : vector<8x256xf32> to vector<256xf32>
    %14 = vector.shape_cast %13 : vector<256xf32> to vector<1x256xf32>
    %15 = arith.mulf %14, %11 : vector<1x256xf32>
    %16 = arith.addf %4, %15 : vector<1x256xf32>
    %c255_i32_9 = arith.constant 255 : i32
    %17 = tpu.dynamic_rotate %6 by %c255_i32_9 dim 1 : vector<8x256xf32>, i32 -> vector<8x256xf32>
    %18 = arith.subf %17, %6 : vector<8x256xf32>
    %c254_i32 = arith.constant 254 : i32
    %19 = tpu.dynamic_rotate %3 by %c254_i32 dim 1 : vector<1x256xf32>, i32 -> vector<1x256xf32>
    %20 = arith.cmpf oeq, %19, %3 : vector<1x256xf32>
    %cst_10 = arith.constant 2.7901787E-4 : f32
    %cst_11 = arith.constant 0.000000e+00 : f32
    %21 = vector.broadcast %cst_10 : f32 to vector<1x256xf32>
    %22 = vector.broadcast %cst_11 : f32 to vector<1x256xf32>
    %23 = arith.select %20, %21, %22 : vector<1x256xi1>, vector<1x256xf32>
    %24 = arith.mulf %18, %18 : vector<8x256xf32>
    %cst_12 = arith.constant dense<0.000000e+00> : vector<256xf32>
    %25 = vector.multi_reduction <add>, %24, %cst_12 [0] : vector<8x256xf32> to vector<256xf32>
    %26 = vector.shape_cast %25 : vector<256xf32> to vector<1x256xf32>
    %27 = arith.mulf %26, %23 : vector<1x256xf32>
    %28 = arith.addf %16, %27 : vector<1x256xf32>
    %29 = vector.shape_cast %28 : vector<1x256xf32> to vector<1x1x256xf32>
    %c0_13 = arith.constant 0 : index
    %c0_14 = arith.constant 0 : index
    %c0_15 = arith.constant 0 : index
    %30 = vector.load %arg4[%c0_13, %c0_14, %c0_15] : memref<1x1x256xf32, #tpu.memory_space<vmem>>, vector<1x1x256xf32>
    tpu.vector_store %arg4[%c0_13, %c0_14, %c0_15], %29 {strides = array<i32>} : memref<1x1x256xf32, #tpu.memory_space<vmem>>, vector<1x1x256xf32>,
    return
  }
  func.func @transform_0(%arg0: i32) -> (i32, i32) {
    %c0_i32 = arith.constant 0 : i32
    %c0_i32_0 = arith.constant 0 : i32
    %c0_i32_1 = arith.constant 0 : i32
    return %c0_i32, %c0_i32_0 : i32, i32
  }
  func.func @transform_1(%arg0: i32) -> (i32, i32) {
    %c0_i32 = arith.constant 0 : i32
    %c0_i32_0 = arith.constant 0 : i32
    return %arg0, %c0_i32 : i32, i32
  }
  func.func @transform_2(%arg0: i32) -> (i32, i32) {
    %c0_i32 = arith.constant 0 : i32
    %c0_i32_0 = arith.constant 0 : i32
    return %arg0, %c0_i32 : i32, i32
  }
  func.func @transform_3(%arg0: i32) -> (i32, i32, i32) {
    %c0_i32 = arith.constant 0 : i32
    %c0_i32_0 = arith.constant 0 : i32
    %c0_i32_1 = arith.constant 0 : i32
    return %arg0, %c0_i32, %c0_i32_0 : i32, i32, i32
  }
}

</mosaic_0001>

<llo_original>
// kernel: tpu_custom_call.1
$region0: #{tpu_custom_call.1}
  #allocation0 [shape = 'u32[]', space=smem, size = 0x4, offset = 0x4, fixed_abs, tag = 'smem constant byte address 0x4 - core index']
  #allocation1 [shape = 'u32[144,128]{1,0:T(1,128)}', space=vmem, size = 0x12000, scoped, tag = 'internal scratch']
  %s0 = inlined_call_operand.hbm [shape: f32[1,256], index: 0, kind: input, shape index: {}]
  %s1 = inlined_call_operand.hbm [shape: f32[8,256], index: 1, kind: input, shape index: {}]
  %s2 = inlined_call_operand.hbm [shape: f32[8,256], index: 2, kind: input, shape index: {}]
  %s3 = inlined_call_operand.hbm [shape: f32[1,1,256], index: 3, kind: output, shape index: {}]
  %s4 = sld [smem:[#allocation0]]
  $region34: #{tpu_custom_call.1} parent=0
    _
  %s6 = ssub.s32 1, %s4
  %s7 = scalar_select 0, %s6, %s4
  $region1: #{tpu_custom_call.1} parent=0
    #allocation2 [shape = 'u8[1024]{0}', space=vmem, size = 0x400, scoped, tag = 'input window, operand 0, single buffered']
    #allocation3 [shape = 's32[1]{0}', space=sflag, size = 0x4, scoped, tag = 'scoped memory for tpu_custom_call.1']
    #allocation4 [shape = 's32[1]{0}', space=sflag, size = 0x4, scoped, tag = 'scoped memory for tpu_custom_call.1']
    #allocation5 [shape = 'u8[8192]{0}', space=vmem, size = 0x2000, scoped, tag = 'input window, operand 1, single buffered']
    #allocation6 [shape = 's32[1]{0}', space=sflag, size = 0x4, scoped, tag = 'scoped memory for tpu_custom_call.1']
    #allocation7 [shape = 'u8[8192]{0}', space=vmem, size = 0x2000, scoped, tag = 'input window, operand 2, single buffered']
    #allocation8 [shape = 'u8[1024]{0}', space=vmem, size = 0x400, scoped, tag = 'output window, operand 0, single buffered']
    %8 = vsyncpa [#allocation3], 0
    %9 = vsyncpa [#allocation6], 0
    %10 = vsyncpa [#allocation4], 0
    // Predicated region
    $region2: #{tpu_custom_call.1} parent=1 // pred_check
      _
    $region3: #{tpu_custom_call.1} parent=1 // pred_check_branch
      %12 = sbr.rel (0) target = $region5
    $region4: #{tpu_custom_call.1} parent=1 // pred_region
      %s14 = ssub.s32 32, 32
      %15 = vsyncadd [#allocation3], %s14
      %s17 = sshll.u32 [#allocation2], 4
      %s18 = int_to_ptr.vmem [resolvable:$true] %s17
      %20 = dma.hbm_to_vmem [thread:$0]  %s0, 32, %s18, [#allocation3]
    $region5: #{tpu_custom_call.1} parent=1 // pred_fallthru
      _
    // Predicated region
    $region6: #{tpu_custom_call.1} parent=1 // pred_check
      _
    $region7: #{tpu_custom_call.1} parent=1 // pred_check_branch
      %22 = sbr.rel (0) target = $region9
    $region8: #{tpu_custom_call.1} parent=1 // pred_region
      %s24 = ssub.s32 256, 256
      %25 = vsyncadd [#allocation6], %s24
      %s27 = sshll.u32 [#allocation5], 4
      %s28 = int_to_ptr.vmem [resolvable:$true] %s27
      %30 = dma.hbm_to_vmem [thread:$0]  %s1, 256, %s28, [#allocation6]
    $region9: #{tpu_custom_call.1} parent=1 // pred_fallthru
      _
    // Predicated region
    $region10: #{tpu_custom_call.1} parent=1 // pred_check
      _
    $region11: #{tpu_custom_call.1} parent=1 // pred_check_branch
      %32 = sbr.rel (0) target = $region13
    $region12: #{tpu_custom_call.1} parent=1 // pred_region
      %s34 = ssub.s32 256, 256
      %35 = vsyncadd [#allocation6], %s34
      %s37 = sshll.u32 [#allocation7], 4
      %s38 = int_to_ptr.vmem [resolvable:$true] %s37
      %40 = dma.hbm_to_vmem [thread:$0]  %s2, 256, %s38, [#allocation6]
    $region13: #{tpu_custom_call.1} parent=1 // pred_fallthru
      _
    // Predicated region
    $region14: #{tpu_custom_call.1} parent=1 // pred_check
      _
    $region15: #{tpu_custom_call.1} parent=1 // pred_check_branch
      %42 = sbr.rel (0) target = $region17
    $region16: #{tpu_custom_call.1} parent=1 // pred_region
      %43 = dma.done [#allocation3], 32
    $region17: #{tpu_custom_call.1} parent=1 // pred_fallthru
      _
    // Predicated region
    $region18: #{tpu_custom_call.1} parent=1 // pred_check
      _
    $region19: #{tpu_custom_call.1} parent=1 // pred_check_branch
      %45 = sbr.rel (0) target = $region21
    $region20: #{tpu_custom_call.1} parent=1 // pred_region
      %46 = dma.done [#allocation6], 256
    $region21: #{tpu_custom_call.1} parent=1 // pred_fallthru
      _
    // Predicated region
    $region22: #{tpu_custom_call.1} parent=1 // pred_check
      _
    $region23: #{tpu_custom_call.1} parent=1 // pred_check_branch
      %48 = sbr.rel (0) target = $region25
    $region24: #{tpu_custom_call.1} parent=1 // pred_region
      %49 = dma.done [#allocation6], 256
    $region25: #{tpu_custom_call.1} parent=1 // pred_fallthru
      _
    %v50 = vld [vmem:[#allocation5] sm:$0xff]
    %v51 = vld [vmem:[#allocation5 + $0x8] sm:$0xff]
    %v52 = vld [vmem:[#allocation7] sm:$0xff]
    %v53 = vld [vmem:[#allocation7 + $0x8] sm:$0xff]
    %v54 = vsub.f32 %v50, %v52
    %v55 = vsub.f32 %v51, %v53
    %v56 = vld [vmem:[#allocation2] sm:$0x3]
    %57 = vrot.lane.b32.xlu0 %v54, 127
    %v58 = vpop.permute.xlu0 %57
    %59 = vrot.lane.b32.xlu0 %v55, 127
    %v60 = vpop.permute.xlu0 %59
    %v61 = vlaneseq
    %v62 = vand.u32 %v61, 127
    %vm63 = vcmp.lt.s32.totalorder %v62, 127
    %v64 = vsel %vm63, %v58, %v60
    %v65 = vsel %vm63, %v60, %v58
    %v66 = vsub.f32 %v64, %v54
    %v67 = vsub.f32 %v65, %v55
    %v69 = vlaneseq
    %v70 = vshrl.u32 %v69, 7
    %v71 = vsub.s32 0, %v70
    %v72 = vrot.slane %v56, %v71
    %v73 = vlaneseq
    %v74 = vshrl.u32 %v73, 7
    %v75 = vsub.s32 1, %v74
    %v76 = vrot.slane %v56, %v75
    %79 = vrot.lane.b32.xlu0 %v72, 127
    %v80 = vpop.permute.xlu0 %79
    %81 = vrot.lane.b32.xlu0 %v76, 127
    %v82 = vpop.permute.xlu0 %81
    %v83 = vsel %vm63, %v80, %v82
    %v84 = vsel %vm63, %v82, %v80
    %vm85 = vcmp.eq.f32.partialorder %v83, %v72
    %vm86 = vcmp.eq.f32.partialorder %v84, %v76
    %v87 = vsel %vm85, 0.00026041668, 0.0
    %v88 = vsel %vm86, 0.00026041668, 0.0
    %v89 = vmul.f32 %v66, %v66
    %v90 = vmul.f32 %v67, %v67
    %v91 = vrot.slane %v89, 4
    %v92 = vadd.f32 %v89, %v91
    %v93 = vrot.slane %v92, 2
    %v94 = vadd.f32 %v92, %v93
    %v95 = vrot.slane %v94, 1
    %v96 = vadd.f32 %v94, %v95
    %v97 = vrot.slane %v90, 4
    %v98 = vadd.f32 %v90, %v97
    %v99 = vrot.slane %v98, 2
    %v100 = vadd.f32 %v98, %v99
    %v101 = vrot.slane %v100, 1
    %v102 = vadd.f32 %v100, %v101
    %v103 = vmul.f32 %v96, %v87
    %v104 = vmul.f32 %v102, %v88
    %v105 = vadd.f32 %v103, 0.0
    %v106 = vadd.f32 %v104, 0.0
    %107 = vrot.lane.b32.xlu0 %v66, 127
    %v108 = vpop.permute.xlu0 %107
    %109 = vrot.lane.b32.xlu0 %v67, 127
    %v110 = vpop.permute.xlu0 %109
    %v111 = vsel %vm63, %v108, %v110
    %v112 = vsel %vm63, %v110, %v108
    %v113 = vsub.f32 %v111, %v66
    %v114 = vsub.f32 %v112, %v67
    %115 = vrot.lane.b32.xlu0 %v72, 126
    %v116 = vpop.permute.xlu0 %115
    %117 = vrot.lane.b32.xlu0 %v76, 126
    %v118 = vpop.permute.xlu0 %117
    %vm119 = vcmp.lt.s32.totalorder %v62, 126
    %v120 = vsel %vm119, %v116, %v118
    %v121 = vsel %vm119, %v118, %v116
    %vm122 = vcmp.eq.f32.partialorder %v120, %v72
    %vm123 = vcmp.eq.f32.partialorder %v121, %v76
    %v124 = vsel %vm122, 0.00027901787, 0.0
    %v125 = vsel %vm123, 0.00027901787, 0.0
    %v126 = vmul.f32 %v113, %v113
    %v127 = vmul.f32 %v114, %v114
    %v128 = vrot.slane %v126, 4
    %v129 = vadd.f32 %v126, %v128
    %v130 = vrot.slane %v129, 2
    %v131 = vadd.f32 %v129, %v130
    %v132 = vrot.slane %v131, 1
    %v133 = vadd.f32 %v131, %v132
    %v134 = vrot.slane %v127, 4
    %v135 = vadd.f32 %v127, %v134
    %v136 = vrot.slane %v135, 2
    %v137 = vadd.f32 %v135, %v136
    %v138 = vrot.slane %v137, 1
    %v139 = vadd.f32 %v137, %v138
    %v140 = vmul.f32 %v133, %v124
    %v141 = vmul.f32 %v139, %v125
    %v142 = vadd.f32 %v105, %v140
    %v143 = vadd.f32 %v106, %v141
    %v146 = vcombine.low %v142, %v143
    %v148 = vunpack.c.l.s4 1966171168
    %v149 = vunpack.c.0.s8 %v148
    %v150 = vlaneseq
    %v151 = vshrl.u32 %v150, 7
    %v152 = vsub.s32 %v149, %v151
    %v153 = vrot.slane %v146, %v152
    %v155 = vunpack.c.l.s4 1966171168
    %v156 = vunpack.c.0.s8 %v155
    %v157 = vlaneseq
    %v158 = vshrl.u32 %v157, 7
    %v159 = vsub.s32 %v156, %v158
    %v160 = vrot.slane %v153, %v159
    %v162 = vlaneseq
    %vm163 = vcmp.ge.s32.totalorder %v162, 0
    %vm164 = vcmp.lt.s32.totalorder %v162, 256
    %vm165 = vmand %vm163, %vm164
    %166 = vst.msk [vmem:[#allocation8] sm:$0x3] %vm165, %v160
    // Predicated region
    $region26: #{tpu_custom_call.1} parent=1 // pred_check
      _
    $region27: #{tpu_custom_call.1} parent=1 // pred_check_branch
      %168 = sbr.rel (0) target = $region29
    $region28: #{tpu_custom_call.1} parent=1 // pred_region
      %s170 = ssub.s32 32, 32
      %171 = vsyncadd [#allocation4], %s170
      %s173 = sshll.u32 [#allocation8], 4
      %s174 = int_to_ptr.vmem [resolvable:$true] %s173
      %176 = dma.vmem_to_hbm [thread:$0]  %s174, 32, %s3, [#allocation4]
    $region29: #{tpu_custom_call.1} parent=1 // pred_fallthru
      _
    // Predicated region
    $region30: #{tpu_custom_call.1} parent=1 // pred_check
      _
    $region31: #{tpu_custom_call.1} parent=1 // pred_check_branch
      %178 = sbr.rel (0) target = $region33
    $region32: #{tpu_custom_call.1} parent=1 // pred_region
      %179 = dma.done [#allocation4], 32
    $region33: #{tpu_custom_call.1} parent=1 // pred_fallthru
      _
    %180 = vsyncpa [#allocation3], 1
    %181 = vsyncpa [#allocation6], 1
    %182 = vsyncpa [#allocation4], 1

</llo_original>
